<compile_context>
chip_gen: v6e
topology: v6e:2x2x1
jax: 0.10.0
libtpu: 0.0.40
codegen_flags: <defaults>
</compile_context>

<pallas_src>
import jax
import jax.numpy as jnp
from jax.experimental import pallas as pl
from jax.experimental.pallas import tpu as pltpu

GAMMA = 0.002
OMEGA = 1.0
BETA = 1.0
ALPHA = 1.0
DELTA = 0.3

LANE = 128  # TPU lane width


def duffing_kernel(x_ref, u_ref, o_ref):
    # x_ref: (2, bn)  rows = [x0, x1], lane axis = batch
    # u_ref: (1, bn)  forcing f
    # o_ref: (2, bn)  rows = [dx0/dt, dx1/dt]
    x0 = x_ref[0:1, :]                      # (1, bn)
    x1 = x_ref[1:2, :]                      # (1, bn)
    f = u_ref[...]                          # (1, bn)

    d_x0_dt = x1
    d_x1_dt = f - GAMMA * x1 - ALPHA * x0 - BETA * (x0 * x0 * x0)

    # Single store of both rows (no masked partial stores on the lane axis).
    o_ref[...] = jnp.concatenate((d_x0_dt, d_x1_dt), axis=0)


def duffing_forward(X, U, *, block_b=32768):
    """X: (B, T, 2), U: (B, T, 1) -> (B, 2). Matches the PyTorch module."""
    B = X.shape[0]

    # Layout plumbing in the wrapper (not in-kernel):
    #   slice t=0 (drop the unread time axis from the DMA entirely),
    #   transpose so batch lands on the 128-lane axis.
    x_t = X[:, 0, :].T          # (2, B)
    u_t = U[:, 0, :].T          # (1, B)

    # Pad batch to a lane-aligned, block-aligned size.
    padded_b = ((B + LANE - 1) // LANE) * LANE
    bn = min(block_b, padded_b)             # bn is a multiple of 128
    padded_b = ((padded_b + bn - 1) // bn) * bn
    if padded_b != B:
        pad = padded_b - B
        x_t = jnp.pad(x_t, ((0, 0), (0, pad)))
        u_t = jnp.pad(u_t, ((0, 0), (0, pad)))

    grid = (padded_b // bn,)

    out_t = pl.pallas_call(
        duffing_kernel,
        out_shape=jax.ShapeDtypeStruct((2, padded_b), X.dtype),
        grid=grid,
        in_specs=[
            pl.BlockSpec((2, bn), lambda i: (0, i)),
            pl.BlockSpec((1, bn), lambda i: (0, i)),
        ],
        out_specs=pl.BlockSpec((2, bn), lambda i: (0, i)),
        compiler_params=pltpu.CompilerParams(
            dimension_semantics=("parallel",),
        ),
    )(x_t, u_t)

    # Back to the PyTorch API layout (B, 2).
    return out_t[:, :B].T


def duffing_reference(X, U):
    x0 = X[:, 0, 0:1]
    x1 = X[:, 0, 1:2]
    f = U[:, 0, :]
    d0 = x1
    d1 = -GAMMA * x1 - ALPHA * x0 - BETA * x0 ** 3 + f
    return jnp.concatenate((d0, d1), axis=1)


if __name__ == "__main__":
    key = jax.random.PRNGKey(0)
    kx, ku = jax.random.split(key)

    B, T = 8, 4  # T > 1 to exercise the "only t=0 is read / DMA'd" path
    X = jax.random.normal(kx, (B, T, 2), dtype=jnp.float32)
    U = jax.random.normal(ku, (B, T, 1), dtype=jnp.float32)

    out = duffing_forward(X, U)
    out = jax.block_until_ready(out)

    ref = duffing_reference(X, U)
    assert out.shape == (B, 2)
    assert jnp.allclose(out, ref, atol=1e-6, rtol=1e-6)

    print("KERNEL_OK")
</pallas_src>

<mosaic_0001>
module attributes {stable_mosaic.version = 11 : i64} {
  func.func @duffing_kernel(%arg0: i32, %arg1: memref<2x128xf32, #tpu.memory_space<vmem>>, %arg2: memref<1x128xf32, #tpu.memory_space<vmem>>, %arg3: memref<2x128xf32, #tpu.memory_space<vmem>>) attributes {dimension_semantics = [#tpu.dimension_semantics<parallel>], iteration_bounds = array<i64: 1>, scalar_prefetch = 0 : i64, scratch_operands = 0 : i64, tpu.core_type = #tpu.core_type<tc>, window_params = [{transform_indices = @transform_0, window_bounds = array<i64: 2, 128>}, {transform_indices = @transform_1, window_bounds = array<i64: 1, 128>}, {transform_indices = @transform_2, window_bounds = array<i64: 2, 128>}]} {
    %c0 = arith.constant 0 : index
    %c0_0 = arith.constant 0 : index
    %0 = vector.load %arg1[%c0, %c0_0] : memref<2x128xf32, #tpu.memory_space<vmem>>, vector<1x128xf32>
    %c1 = arith.constant 1 : index
    %c0_1 = arith.constant 0 : index
    %1 = vector.load %arg1[%c1, %c0_1] : memref<2x128xf32, #tpu.memory_space<vmem>>, vector<1x128xf32>
    %c0_2 = arith.constant 0 : index
    %c0_3 = arith.constant 0 : index
    %2 = vector.load %arg2[%c0_2, %c0_3] : memref<1x128xf32, #tpu.memory_space<vmem>>, vector<1x128xf32>
    %cst = arith.constant 2.000000e-03 : f32
    %3 = vector.broadcast %cst : f32 to vector<1x128xf32>
    %4 = arith.mulf %3, %1 : vector<1x128xf32>
    %5 = arith.subf %2, %4 : vector<1x128xf32>
    %cst_4 = arith.constant 1.000000e+00 : f32
    %6 = vector.broadcast %cst_4 : f32 to vector<1x128xf32>
    %7 = arith.mulf %6, %0 : vector<1x128xf32>
    %8 = arith.subf %5, %7 : vector<1x128xf32>
    %9 = arith.mulf %0, %0 : vector<1x128xf32>
    %10 = arith.mulf %9, %0 : vector<1x128xf32>
    %cst_5 = arith.constant 1.000000e+00 : f32
    %11 = vector.broadcast %cst_5 : f32 to vector<1x128xf32>
    %12 = arith.mulf %11, %10 : vector<1x128xf32>
    %13 = arith.subf %8, %12 : vector<1x128xf32>
    %14 = tpu.concatenate %1, %13 in 0 : vector<1x128xf32>, vector<1x128xf32> -> vector<2x128xf32>
    %c0_6 = arith.constant 0 : index
    %c0_7 = arith.constant 0 : index
    %15 = vector.load %arg3[%c0_6, %c0_7] : memref<2x128xf32, #tpu.memory_space<vmem>>, vector<2x128xf32>
    tpu.vector_store %arg3[%c0_6, %c0_7], %14 {strides = array<i32>} : memref<2x128xf32, #tpu.memory_space<vmem>>, vector<2x128xf32>,
    return
  }
  func.func @transform_0(%arg0: i32) -> (i32, i32) {
    %c0_i32 = arith.constant 0 : i32
    %c0_i32_0 = arith.constant 0 : i32
    return %c0_i32, %arg0 : i32, i32
  }
  func.func @transform_1(%arg0: i32) -> (i32, i32) {
    %c0_i32 = arith.constant 0 : i32
    %c0_i32_0 = arith.constant 0 : i32
    return %c0_i32, %arg0 : i32, i32
  }
  func.func @transform_2(%arg0: i32) -> (i32, i32) {
    %c0_i32 = arith.constant 0 : i32
    %c0_i32_0 = arith.constant 0 : i32
    return %c0_i32, %arg0 : i32, i32
  }
}

</mosaic_0001>

<llo_original>
// kernel: tpu_custom_call.1
$region0: #{tpu_custom_call.1}
  #allocation0 [shape = 'u32[]', space=smem, size = 0x4, offset = 0x4, fixed_abs, tag = 'smem constant byte address 0x4 - core index']
  #allocation1 [shape = 'u32[144,128]{1,0:T(1,128)}', space=vmem, size = 0x12000, scoped, tag = 'internal scratch']
  %s0 = inlined_call_operand.hbm [shape: f32[2,128], index: 0, kind: input, shape index: {}]
  %s1 = inlined_call_operand.vmem [shape: f32[1,128], index: 1, kind: input, shape index: {}]
  %s2 = inlined_call_operand.hbm [shape: f32[2,128], index: 2, kind: output, shape index: {}]
  %s3 = sld [smem:[#allocation0]]
  $region22: #{tpu_custom_call.1} parent=0
    _
  %s5 = ssub.s32 1, %s3
  %s6 = scalar_select 0, %s5, %s3
  $region1: #{tpu_custom_call.1} parent=0
    #allocation2 [shape = 'u8[1024]{0}', space=vmem, size = 0x400, scoped, tag = 'input window, operand 0, single buffered']
    #allocation3 [shape = 's32[1]{0}', space=sflag, size = 0x4, scoped, tag = 'scoped memory for tpu_custom_call.1']
    #allocation4 [shape = 's32[1]{0}', space=sflag, size = 0x4, scoped, tag = 'scoped memory for tpu_custom_call.1']
    #allocation5 [shape = 'u8[1024]{0}', space=vmem, size = 0x400, scoped, tag = 'output window, operand 0, single buffered']
    %7 = vsyncpa [#allocation3], 0
    %8 = vsyncpa [#allocation4], 0
    // Predicated region
    $region2: #{tpu_custom_call.1} parent=1 // pred_check
      _
    $region3: #{tpu_custom_call.1} parent=1 // pred_check_branch
      %10 = sbr.rel (0) target = $region5
    $region4: #{tpu_custom_call.1} parent=1 // pred_region
      %s12 = ssub.s32 32, 32
      %13 = vsyncadd [#allocation3], %s12
      %s15 = sshll.u32 [#allocation2], 4
      %s16 = int_to_ptr.vmem [resolvable:$true] %s15
      %18 = dma.hbm_to_vmem [thread:$0]  %s0, 32, %s16, [#allocation3]
    $region5: #{tpu_custom_call.1} parent=1 // pred_fallthru
      _
    // Predicated region
    $region6: #{tpu_custom_call.1} parent=1 // pred_check
      _
    $region7: #{tpu_custom_call.1} parent=1 // pred_check_branch
      %20 = sbr.rel (0) target = $region9
    $region8: #{tpu_custom_call.1} parent=1 // pred_region
      _
    $region9: #{tpu_custom_call.1} parent=1 // pred_fallthru
      _
    // Predicated region
    $region10: #{tpu_custom_call.1} parent=1 // pred_check
      _
    $region11: #{tpu_custom_call.1} parent=1 // pred_check_branch
      %22 = sbr.rel (0) target = $region13
    $region12: #{tpu_custom_call.1} parent=1 // pred_region
      %23 = dma.done [#allocation3], 32
    $region13: #{tpu_custom_call.1} parent=1 // pred_fallthru
      _
    %v24 = vld [vmem:[#allocation2] sm:$0x1]
    %v25 = vld [vmem:[#allocation2 + $0x1] sm:$0x1]
    %v26 = vld [vmem:[%s1] sm:$0x1]
    %v27 = vmul.f32 %v25, 0.002
    %v28 = vsub.f32 %v26, %v27
    %v29 = vsub.f32 %v28, %v24
    %v30 = vmul.f32 %v24, %v24
    %v31 = vmul.f32 %v30, %v24
    %v32 = vsub.f32 %v29, %v31
    %v34 = vlaneseq
    %v35 = vshrl.u32 %v34, 7
    %v36 = vsub.s32 0, %v35
    %v37 = vrot.slane %v32, %v36
    %vm39 = vcmask 1040384
    %v40 = vsel %vm39, %v25, %v37
    %41 = vst [vmem:[#allocation5] sm:$0x3] %v40
    // Predicated region
    $region14: #{tpu_custom_call.1} parent=1 // pred_check
      _
    $region15: #{tpu_custom_call.1} parent=1 // pred_check_branch
      %43 = sbr.rel (0) target = $region17
    $region16: #{tpu_custom_call.1} parent=1 // pred_region
      %s45 = ssub.s32 32, 32
      %46 = vsyncadd [#allocation4], %s45
      %s48 = sshll.u32 [#allocation5], 4
      %s49 = int_to_ptr.vmem [resolvable:$true] %s48
      %51 = dma.vmem_to_hbm [thread:$0]  %s49, 32, %s2, [#allocation4]
    $region17: #{tpu_custom_call.1} parent=1 // pred_fallthru
      _
    // Predicated region
    $region18: #{tpu_custom_call.1} parent=1 // pred_check
      _
    $region19: #{tpu_custom_call.1} parent=1 // pred_check_branch
      %53 = sbr.rel (0) target = $region21
    $region20: #{tpu_custom_call.1} parent=1 // pred_region
      %54 = dma.done [#allocation4], 32
    $region21: #{tpu_custom_call.1} parent=1 // pred_fallthru
      _
    %55 = vsyncpa [#allocation3], 1
    %56 = vsyncpa [#allocation4], 1

</llo_original>
